<compile_context>
chip_gen: v5e
topology: v5e:2x2
jax: 0.10.0
libtpu: 0.0.40
codegen_flags: <defaults>
</compile_context>

<pallas_src>
import jax
import jax.numpy as jnp
from jax.experimental import pallas as pl
from jax.experimental.pallas import tpu as pltpu

DTYPE = jnp.float32
LANE = 128
SUBLANE = 8


def _round_up(x, m):
    return (x + m - 1) // m * m


# ---------------------------------------------------------------------------
# Fused kernel: fc1 (pre-subtracted / pre-transposed weight) followed by
# num_lc rounds of sigmoid + block-diagonal LocallyConnected matmul.
# ---------------------------------------------------------------------------
def _make_fused_kernel(num_lc):
    def kernel(*refs):
        x_ref, w1_ref, b1_ref = refs[0], refs[1], refs[2]
        out_ref = refs[-1]

        # fc1_pos(x) - fc1_neg(x)  ==  x @ (W+ - W-)^T + (b+ - b-)
        y = jnp.dot(x_ref[...], w1_ref[...],
                    preferred_element_type=jnp.float32) + b1_ref[...]

        # sigmoid -> LocallyConnected (as one lane-dense block-diag matmul)
        for l in range(num_lc):
            bd_ref = refs[3 + 2 * l]     # [H_in, H_out] block-diagonal weight
            bias_ref = refs[4 + 2 * l]   # [1, H_out]
            h = jax.nn.sigmoid(y)
            y = jnp.dot(h, bd_ref[...],
                        preferred_element_type=jnp.float32) + bias_ref[...]

        out_ref[...] = y.astype(out_ref.dtype)

    return kernel


def _fused_forward(x, w1t, b1, lc_params, *, tile_n=None,
                   vmem_budget_bytes=16 * 1024 * 1024):
    """Whole NotearsMLP forward as one batch-tiled pallas_call.

    x        : [n, pd]
    w1t      : [pd, H1]  fc1 weight, pre-subtracted + transposed, lane-padded
    b1       : [1, H1]   fc1 bias, pre-subtracted, lane-padded
    lc_params: list of (bd [H_in, H_out], bias [1, H_out]) block-diag LC params
    returns  : [n_pad, H_last] lane-dense slab (caller slices to [n, d])
    """
    n, pd = x.shape
    h_dims = [w1t.shape[1]] + [bd.shape[1] for bd, _ in lc_params]
    h_last = h_dims[-1]
    h_max = max(h_dims)

    if tile_n is None:
        # Per-row VMEM: double-buffered x tile + out tile + ~2 live
        # intermediates.  Budget kept conservative so double-buffering
        # survives v7x's 64 MiB physical / 32 MiB scoped VMEM.
        row_bytes = 4 * (2 * pd + 2 * h_last + 2 * h_max)
        tile_n = vmem_budget_bytes // max(row_bytes, 1)
        tile_n = max(SUBLANE, min(1024, (tile_n // SUBLANE) * SUBLANE))
    tile_n = min(tile_n, _round_up(n, SUBLANE))
    tile_n = max(SUBLANE, (tile_n // SUBLANE) * SUBLANE)

    # Pad the batch so every tile is full-rate (no masked tail tile).
    n_pad = _round_up(n, tile_n)
    if n_pad != n:
        x = jnp.pad(x, ((0, n_pad - n), (0, 0)))

    grid = (n_pad // tile_n,)

    def resident(shape):
        # Whole-array block with a constant index_map -> stays VMEM-resident
        # across batch tiles (no re-DMA).
        return pl.BlockSpec(shape, lambda i: tuple(0 for _ in shape))

    in_specs = [
        pl.BlockSpec((tile_n, pd), lambda i: (i, 0)),   # x tile
        resident(w1t.shape),
        resident(b1.shape),
    ]
    args = [x, w1t, b1]
    for bd, bias in lc_params:
        in_specs += [resident(bd.shape), resident(bias.shape)]
        args += [bd, bias]

    return pl.pallas_call(
        _make_fused_kernel(len(lc_params)),
        grid=grid,
        out_shape=jax.ShapeDtypeStruct((n_pad, h_last), DTYPE),
        in_specs=in_specs,
        out_specs=pl.BlockSpec((tile_n, h_last), lambda i: (i, 0)),
        compiler_params=pltpu.CompilerParams(
            dimension_semantics=("parallel",),
            vmem_limit_bytes=48 * 1024 * 1024,
        ),
    )(*args)


# ---------------------------------------------------------------------------
# NotearsMLP in JAX, driving the single fused Pallas kernel.
# ---------------------------------------------------------------------------
class NotearsMLPPallas:
    def __init__(self, dims, out_dims, key, bias=True):
        assert len(dims) >= 2
        assert dims[-1] == 1
        self.dims = dims
        self.pd = dims[0]
        self.d = out_dims

        n_lc = len(dims) - 2
        keys = jax.random.split(key, 4 + 2 * max(n_lc, 1))

        # fc1_pos / fc1_neg : Linear(pd -> d * dims[1])  (torch uniform init)
        out1 = self.d * dims[1]
        lim = (1.0 / self.pd) ** 0.5
        self.w_pos = jax.random.uniform(keys[0], (out1, self.pd), DTYPE, -lim, lim)
        self.w_neg = jax.random.uniform(keys[1], (out1, self.pd), DTYPE, -lim, lim)
        self.b_pos = jax.random.uniform(keys[2], (out1,), DTYPE, -lim, lim)
        self.b_neg = jax.random.uniform(keys[3], (out1,), DTYPE, -lim, lim)

        # LocallyConnected layers: weight [d, m_in, m_out], bias [d, m_out]
        self.fc2 = []
        for l in range(n_lc):
            m_in, m_out = dims[l + 1], dims[l + 2]
            lim2 = (1.0 / m_in) ** 0.5
            w = jax.random.uniform(keys[4 + 2 * l], (self.d, m_in, m_out),
                                   DTYPE, -lim2, lim2)
            bb = jax.random.uniform(keys[5 + 2 * l], (self.d, m_out),
                                    DTYPE, -lim2, lim2)
            self.fc2.append((w, bb))

        # Pack parameters ONCE: pre-subtract/transpose fc1, build lane-padded
        # block-diagonal LC weights.
        self._packed = self._pack_params()

    def _pack_params(self):
        d = self.d
        # fc1: W = (W+ - W-)^T  -> [pd, d*m1], bias b = b+ - b-; pad to 128 lanes.
        w1 = (self.w_pos - self.w_neg).T
        b1 = (self.b_pos - self.b_neg)[None, :]
        h1 = _round_up(d * self.dims[1], LANE)
        w1 = jnp.pad(w1, ((0, 0), (0, h1 - w1.shape[1])))
        b1 = jnp.pad(b1, ((0, 0), (0, h1 - b1.shape[1])))

        # LC layers -> zero-padded block-diagonal matrices.  Padded input rows
        # are zero, so the sigmoid(0)=0.5 values in padded activation columns
        # contribute nothing.
        lc = []
        h_in = h1
        for (w, bb) in self.fc2:
            _, m_in, m_out = w.shape
            h_out = _round_up(d * m_out, LANE)
            eye = jnp.eye(d, dtype=w.dtype)
            bd = jnp.einsum("jk,jmo->jmko", eye, w).reshape(d * m_in, d * m_out)
            bd = jnp.pad(bd, ((0, h_in - d * m_in), (0, h_out - d * m_out)))
            bias = jnp.pad(bb.reshape(1, d * m_out),
                           ((0, 0), (0, h_out - d * m_out)))
            lc.append((bd, bias))
            h_in = h_out
        return w1, b1, lc

    def forward(self, x):
        w1, b1, lc = self._packed
        n = x.shape[0]
        out = _fused_forward(x, w1, b1, lc)
        # Last LC layer has m_out == 1, so the true output width is d (this is
        # exactly the squeeze(dim=2) of the reference).  Slice off batch/lane
        # padding in the wrapper.
        return out[:n, :self.d]

    def forward_ref(self, x):
        # Pure-JAX reference for correctness checking.
        y = x @ (self.w_pos - self.w_neg).T + (self.b_pos - self.b_neg)
        y = y.reshape(-1, self.d, self.dims[1])
        for (w, bb) in self.fc2:
            y = jax.nn.sigmoid(y)
            y = jnp.einsum("ndm,dmo->ndo", y, w) + bb[None]
        return jnp.squeeze(y, axis=2)


if __name__ == "__main__":
    key = jax.random.PRNGKey(0)
    k_param, k_x = jax.random.split(key)

    # Small shapes consistent with the module: dims=[pd, m1, m2, 1], out_dims=d.
    dims = [6, 16, 8, 1]
    out_dims = 5
    n = 32

    model = NotearsMLPPallas(dims, out_dims, k_param, bias=True)
    x = jax.random.normal(k_x, (n, dims[0]), dtype=DTYPE)

    out = jax.block_until_ready(model.forward(x))

    ref = model.forward_ref(x)
    assert out.shape == (n, out_dims), out.shape
    assert jnp.allclose(out, ref, atol=1e-5, rtol=1e-5), (
        f"max abs err = {jnp.max(jnp.abs(out - ref))}"
    )

    print("KERNEL_OK")
</pallas_src>

<mosaic_0001>
module attributes {stable_mosaic.version = 11 : i64} {
  func.func @kernel(%arg0: i32, %arg1: memref<32x6xf32, #tpu.memory_space<vmem>>, %arg2: memref<6x128xf32, #tpu.memory_space<vmem>>, %arg3: memref<1x128xf32, #tpu.memory_space<vmem>>, %arg4: memref<128x128xf32, #tpu.memory_space<vmem>>, %arg5: memref<1x128xf32, #tpu.memory_space<vmem>>, %arg6: memref<128x128xf32, #tpu.memory_space<vmem>>, %arg7: memref<1x128xf32, #tpu.memory_space<vmem>>, %arg8: memref<32x128xf32, #tpu.memory_space<vmem>>) attributes {dimension_semantics = [#tpu.dimension_semantics<parallel>], iteration_bounds = array<i64: 1>, scalar_prefetch = 0 : i64, scratch_operands = 0 : i64, tpu.core_type = #tpu.core_type<tc>, window_params = [{transform_indices = @transform_0, window_bounds = array<i64: 32, 6>}, {pipeline_mode = #tpu.pipeline_mode<synchronous>, transform_indices = @transform_1, window_bounds = array<i64: 6, 128>}, {pipeline_mode = #tpu.pipeline_mode<synchronous>, transform_indices = @transform_2, window_bounds = array<i64: 1, 128>}, {pipeline_mode = #tpu.pipeline_mode<synchronous>, transform_indices = @transform_3, window_bounds = array<i64: 128, 128>}, {pipeline_mode = #tpu.pipeline_mode<synchronous>, transform_indices = @transform_4, window_bounds = array<i64: 1, 128>}, {pipeline_mode = #tpu.pipeline_mode<synchronous>, transform_indices = @transform_5, window_bounds = array<i64: 128, 128>}, {pipeline_mode = #tpu.pipeline_mode<synchronous>, transform_indices = @transform_6, window_bounds = array<i64: 1, 128>}, {transform_indices = @transform_7, window_bounds = array<i64: 32, 128>}]} {
    %c0 = arith.constant 0 : index
    %c0_0 = arith.constant 0 : index
    %0 = vector.load %arg1[%c0, %c0_0] : memref<32x6xf32, #tpu.memory_space<vmem>>, vector<32x6xf32>
    %c0_1 = arith.constant 0 : index
    %c0_2 = arith.constant 0 : index
    %1 = vector.load %arg2[%c0_1, %c0_2] : memref<6x128xf32, #tpu.memory_space<vmem>>, vector<6x128xf32>
    %cst = arith.constant dense<0.000000e+00> : vector<32x128xf32>
    %2 = tpu.matmul %0, %1, %cst {dimension_numbers = #tpu.dot_dimension_numbers<[1], [0], [0], [1], [0, 0, 1, 1], [], []>} : vector<32x6xf32>, vector<6x128xf32>, vector<32x128xf32> -> vector<32x128xf32>
    %c0_3 = arith.constant 0 : index
    %c0_4 = arith.constant 0 : index
    %3 = vector.load %arg3[%c0_3, %c0_4] : memref<1x128xf32, #tpu.memory_space<vmem>>, vector<1x128xf32>
    %4 = vector.broadcast %3 : vector<1x128xf32> to vector<32x128xf32>
    %5 = arith.addf %2, %4 : vector<32x128xf32>
    %6 = arith.negf %5 : vector<32x128xf32>
    %7 = math.exp %6 : vector<32x128xf32>
    %cst_5 = arith.constant 1.000000e+00 : f32
    %8 = vector.broadcast %cst_5 : f32 to vector<32x128xf32>
    %9 = arith.addf %8, %7 : vector<32x128xf32>
    %10 = arith.divf %8, %9 : vector<32x128xf32>
    %c0_6 = arith.constant 0 : index
    %c0_7 = arith.constant 0 : index
    %11 = vector.load %arg4[%c0_6, %c0_7] : memref<128x128xf32, #tpu.memory_space<vmem>>, vector<128x128xf32>
    %cst_8 = arith.constant dense<0.000000e+00> : vector<32x128xf32>
    %12 = tpu.matmul %10, %11, %cst_8 {dimension_numbers = #tpu.dot_dimension_numbers<[1], [0], [0], [1], [0, 0, 1, 1], [], []>} : vector<32x128xf32>, vector<128x128xf32>, vector<32x128xf32> -> vector<32x128xf32>
    %c0_9 = arith.constant 0 : index
    %c0_10 = arith.constant 0 : index
    %13 = vector.load %arg5[%c0_9, %c0_10] : memref<1x128xf32, #tpu.memory_space<vmem>>, vector<1x128xf32>
    %14 = vector.broadcast %13 : vector<1x128xf32> to vector<32x128xf32>
    %15 = arith.addf %12, %14 : vector<32x128xf32>
    %16 = arith.negf %15 : vector<32x128xf32>
    %17 = math.exp %16 : vector<32x128xf32>
    %cst_11 = arith.constant 1.000000e+00 : f32
    %18 = vector.broadcast %cst_11 : f32 to vector<32x128xf32>
    %19 = arith.addf %18, %17 : vector<32x128xf32>
    %20 = arith.divf %18, %19 : vector<32x128xf32>
    %c0_12 = arith.constant 0 : index
    %c0_13 = arith.constant 0 : index
    %21 = vector.load %arg6[%c0_12, %c0_13] : memref<128x128xf32, #tpu.memory_space<vmem>>, vector<128x128xf32>
    %cst_14 = arith.constant dense<0.000000e+00> : vector<32x128xf32>
    %22 = tpu.matmul %20, %21, %cst_14 {dimension_numbers = #tpu.dot_dimension_numbers<[1], [0], [0], [1], [0, 0, 1, 1], [], []>} : vector<32x128xf32>, vector<128x128xf32>, vector<32x128xf32> -> vector<32x128xf32>
    %c0_15 = arith.constant 0 : index
    %c0_16 = arith.constant 0 : index
    %23 = vector.load %arg7[%c0_15, %c0_16] : memref<1x128xf32, #tpu.memory_space<vmem>>, vector<1x128xf32>
    %24 = vector.broadcast %23 : vector<1x128xf32> to vector<32x128xf32>
    %25 = arith.addf %22, %24 : vector<32x128xf32>
    %c0_17 = arith.constant 0 : index
    %c0_18 = arith.constant 0 : index
    %26 = vector.load %arg8[%c0_17, %c0_18] : memref<32x128xf32, #tpu.memory_space<vmem>>, vector<32x128xf32>
    tpu.vector_store %arg8[%c0_17, %c0_18], %25 {strides = array<i32>} : memref<32x128xf32, #tpu.memory_space<vmem>>, vector<32x128xf32>,
    return
  }
  func.func @transform_0(%arg0: i32) -> (i32, i32) {
    %c0_i32 = arith.constant 0 : i32
    %c0_i32_0 = arith.constant 0 : i32
    return %arg0, %c0_i32 : i32, i32
  }
  func.func @transform_1(%arg0: i32) -> (i32, i32) {
    %c0_i32 = arith.constant 0 : i32
    %c0_i32_0 = arith.constant 0 : i32
    %c0_i32_1 = arith.constant 0 : i32
    return %c0_i32, %c0_i32_0 : i32, i32
  }
  func.func @transform_2(%arg0: i32) -> (i32, i32) {
    %c0_i32 = arith.constant 0 : i32
    %c0_i32_0 = arith.constant 0 : i32
    %c0_i32_1 = arith.constant 0 : i32
    return %c0_i32, %c0_i32_0 : i32, i32
  }
  func.func @transform_3(%arg0: i32) -> (i32, i32) {
    %c0_i32 = arith.constant 0 : i32
    %c0_i32_0 = arith.constant 0 : i32
    %c0_i32_1 = arith.constant 0 : i32
    return %c0_i32, %c0_i32_0 : i32, i32
  }
  func.func @transform_4(%arg0: i32) -> (i32, i32) {
    %c0_i32 = arith.constant 0 : i32
    %c0_i32_0 = arith.constant 0 : i32
    %c0_i32_1 = arith.constant 0 : i32
    return %c0_i32, %c0_i32_0 : i32, i32
  }
  func.func @transform_5(%arg0: i32) -> (i32, i32) {
    %c0_i32 = arith.constant 0 : i32
    %c0_i32_0 = arith.constant 0 : i32
    %c0_i32_1 = arith.constant 0 : i32
    return %c0_i32, %c0_i32_0 : i32, i32
  }
  func.func @transform_6(%arg0: i32) -> (i32, i32) {
    %c0_i32 = arith.constant 0 : i32
    %c0_i32_0 = arith.constant 0 : i32
    %c0_i32_1 = arith.constant 0 : i32
    return %c0_i32, %c0_i32_0 : i32, i32
  }
  func.func @transform_7(%arg0: i32) -> (i32, i32) {
    %c0_i32 = arith.constant 0 : i32
    %c0_i32_0 = arith.constant 0 : i32
    return %arg0, %c0_i32 : i32, i32
  }
}

</mosaic_0001>

<llo_original>
// kernel: tpu_custom_call.1
$region0: #{tpu_custom_call.1}
  #allocation0 [shape = 'u32[]', space=smem, size = 0x4, offset = 0x4, fixed_abs, tag = 'smem constant byte address 0x4 - core index']
  #allocation1 [shape = 'u32[72,128]{1,0:T(1,128)}', space=vmem, size = 0x9000, scoped, tag = 'internal scratch']
  %s0 = inlined_call_operand.vmem [shape: f32[32,6], index: 0, kind: input, shape index: {}]
  %s1 = inlined_call_operand.vmem [shape: f32[6,128], index: 1, kind: input, shape index: {}]
  %s2 = inlined_call_operand.vmem [shape: f32[1,128], index: 2, kind: input, shape index: {}]
  %s3 = inlined_call_operand.hbm [shape: f32[128,128], index: 3, kind: input, shape index: {}]
  %s4 = inlined_call_operand.vmem [shape: f32[1,128], index: 4, kind: input, shape index: {}]
  %s5 = inlined_call_operand.hbm [shape: f32[128,128], index: 5, kind: input, shape index: {}]
  %s6 = inlined_call_operand.vmem [shape: f32[1,128], index: 6, kind: input, shape index: {}]
  %s7 = inlined_call_operand.hbm [shape: f32[32,128], index: 7, kind: output, shape index: {}]
  %s8 = sld [smem:[#allocation0]]
  $region46: #{tpu_custom_call.1} parent=0
    _
  %s10 = ssub.s32 1, %s8
  %s11 = scalar_select 0, %s10, %s8
  $region1: #{tpu_custom_call.1} parent=0
    #allocation2 [shape = 'u8[65536]{0}', space=vmem, size = 0x10000, scoped, tag = 'input window, operand 3, single buffered']
    #allocation3 [shape = 's32[1]{0}', space=sflag, size = 0x4, scoped, tag = 'scoped memory for tpu_custom_call.1']
    #allocation4 [shape = 's32[1]{0}', space=sflag, size = 0x4, scoped, tag = 'scoped memory for tpu_custom_call.1']
    #allocation5 [shape = 'u8[65536]{0}', space=vmem, size = 0x10000, scoped, tag = 'input window, operand 5, single buffered']
    #allocation6 [shape = 's32[1]{0}', space=sflag, size = 0x4, scoped, tag = 'scoped memory for tpu_custom_call.1']
    #allocation7 [shape = 'u8[16384]{0}', space=vmem, size = 0x4000, scoped, tag = 'output window, operand 0, single buffered']
    %12 = vsyncpa [#allocation3], 0
    %13 = vsyncpa [#allocation6], 0
    %14 = vsyncpa [#allocation4], 0
    // Predicated region
    $region2: #{tpu_custom_call.1} parent=1 // pred_check
      _
    $region3: #{tpu_custom_call.1} parent=1 // pred_check_branch
      %16 = sbr.rel (0) target = $region5
    $region4: #{tpu_custom_call.1} parent=1 // pred_region
      _
    $region5: #{tpu_custom_call.1} parent=1 // pred_fallthru
      _
    // Predicated region
    $region6: #{tpu_custom_call.1} parent=1 // pred_check
      _
    $region7: #{tpu_custom_call.1} parent=1 // pred_check_branch
      %18 = sbr.rel (0) target = $region9
    $region8: #{tpu_custom_call.1} parent=1 // pred_region
      _
    $region9: #{tpu_custom_call.1} parent=1 // pred_fallthru
      _
    // Predicated region
    $region10: #{tpu_custom_call.1} parent=1 // pred_check
      _
    $region11: #{tpu_custom_call.1} parent=1 // pred_check_branch
      %20 = sbr.rel (0) target = $region13
    $region12: #{tpu_custom_call.1} parent=1 // pred_region
      _
    $region13: #{tpu_custom_call.1} parent=1 // pred_fallthru
      _
    // Predicated region
    $region14: #{tpu_custom_call.1} parent=1 // pred_check
      _
    $region15: #{tpu_custom_call.1} parent=1 // pred_check_branch
      %22 = sbr.rel (0) target = $region17
    $region16: #{tpu_custom_call.1} parent=1 // pred_region
      %24 = vsyncadd [#allocation3], 0
      %s25 = sshll.u32 %s3, 4
      %s26 = int_to_ptr.hbm [resolvable:$true] %s25
      %s27 = sshll.u32 [#allocation2], 4
      %s28 = int_to_ptr.vmem [resolvable:$true] %s27
      %33 = dma.hbm_to_vmem [thread:$0]  %s26, 2048, %s28, [#allocation3], 128, 128, 8
    $region17: #{tpu_custom_call.1} parent=1 // pred_fallthru
      _
    // Predicated region
    $region18: #{tpu_custom_call.1} parent=1 // pred_check
      _
    $region19: #{tpu_custom_call.1} parent=1 // pred_check_branch
      %35 = sbr.rel (0) target = $region21
    $region20: #{tpu_custom_call.1} parent=1 // pred_region
      _
    $region21: #{tpu_custom_call.1} parent=1 // pred_fallthru
      _
    // Predicated region
    $region22: #{tpu_custom_call.1} parent=1 // pred_check
      _
    $region23: #{tpu_custom_call.1} parent=1 // pred_check_branch
      %37 = sbr.rel (0) target = $region25
    $region24: #{tpu_custom_call.1} parent=1 // pred_region
      %39 = vsyncadd [#allocation6], 0
      %s40 = sshll.u32 %s5, 4
      %s41 = int_to_ptr.hbm [resolvable:$true] %s40
      %s42 = sshll.u32 [#allocation5], 4
      %s43 = int_to_ptr.vmem [resolvable:$true] %s42
      %48 = dma.hbm_to_vmem [thread:$0]  %s41, 2048, %s43, [#allocation6], 128, 128, 8
    $region25: #{tpu_custom_call.1} parent=1 // pred_fallthru
      _
    // Predicated region
    $region26: #{tpu_custom_call.1} parent=1 // pred_check
      _
    $region27: #{tpu_custom_call.1} parent=1 // pred_check_branch
      %50 = sbr.rel (0) target = $region29
    $region28: #{tpu_custom_call.1} parent=1 // pred_region
      _
    $region29: #{tpu_custom_call.1} parent=1 // pred_fallthru
      _
    // Predicated region
    $region30: #{tpu_custom_call.1} parent=1 // pred_check
      _
    $region31: #{tpu_custom_call.1} parent=1 // pred_check_branch
      %52 = sbr.rel (0) target = $region33
    $region32: #{tpu_custom_call.1} parent=1 // pred_region
      %54 = dma.done [#allocation3], 2048
    $region33: #{tpu_custom_call.1} parent=1 // pred_fallthru
      _
    // Predicated region
    $region34: #{tpu_custom_call.1} parent=1 // pred_check
      _
    $region35: #{tpu_custom_call.1} parent=1 // pred_check_branch
      %56 = sbr.rel (0) target = $region37
    $region36: #{tpu_custom_call.1} parent=1 // pred_region
      %58 = dma.done [#allocation6], 2048
    $region37: #{tpu_custom_call.1} parent=1 // pred_fallthru
      _
    %v59 = vld [vmem:[%s0] sm:$0xff]
    %v60 = vld [vmem:[%s0 + $0x8] sm:$0xff]
    %v61 = vld [vmem:[%s0 + $0x10] sm:$0xff]
    %v62 = vld [vmem:[%s0 + $0x18] sm:$0xff]
    %v63 = vld [vmem:[%s1] sm:$0x3f]
    %v64 = vld [vmem:[%s2] sm:$0x1]
    %v66 = vperm.slane %v64, 0
    %vm68 = vcmask 48128
    %v70 = vsel %vm68, %v59, 0
    %v73 = vsel %vm68, %v60, 0
    %v76 = vsel %vm68, %v61, 0
    %v79 = vsel %vm68, %v62, 0
    %vm81 = vcmask 1045504
    %v83 = vsel %vm81, %v63, 0
    %85 = vmatpush.msra.mxu0 0.0
    %86 = vmatpush.msra.mxu0 0.0
    %87 = vmatpush.msra.mxu0 0.0
    %88 = vmatpush.msra.mxu0 0.0
    %89 = vmatpush.msra.mxu0 0.0
    %90 = vmatpush.msra.mxu0 0.0
    %91 = vmatpush.msra.mxu0 0.0
    %92 = vmatpush.msra.mxu0 0.0
    %93 = vmatpush.msra.mxu0 0.0
    %94 = vmatpush.msra.mxu0 0.0
    %95 = vmatpush.msra.mxu0 0.0
    %96 = vmatpush.msra.mxu0 0.0
    %97 = vmatpush.msra.mxu0 0.0
    %98 = vmatpush.msra.mxu0 0.0
    %99 = vmatpush.msra.mxu0 0.0
    %100 = vmatpush.msra.mxu0 %v83
    %101 = vmatmul.f32.gmra.mxu0 %v70
    %v102 = vpop.f32.mrf.mxu0
    %v103 = vadd.f32 %v66, %v102
    %104 = vmatmul.f32.gmra.mxu0 %v73
    %v105 = vpop.f32.mrf.mxu0
    %v106 = vadd.f32 %v66, %v105
    %107 = vmatmul.f32.gmra.mxu0 %v76
    %v108 = vpop.f32.mrf.mxu0
    %v109 = vadd.f32 %v66, %v108
    %110 = vmatmul.f32.gmra.mxu0 %v79
    %v111 = vpop.f32.mrf.mxu0
    %v112 = vadd.f32 %v66, %v111
    %113 = vdwg.mxu0
    %v114 = vxor.u32 %v103, 2147483648
    %v115 = vxor.u32 %v106, 2147483648
    %v116 = vxor.u32 %v109, 2147483648
    %v117 = vxor.u32 %v112, 2147483648
    %v118 = vmul.f32 %v114, 1.442695
    %v119 = vpow.pop %v118
    %v120 = vmul.f32 %v115, 1.442695
    %v121 = vpow.pop %v120
    %v122 = vmul.f32 %v116, 1.442695
    %v123 = vpow.pop %v122
    %v124 = vmul.f32 %v117, 1.442695
    %v125 = vpow.pop %v124
    %v126 = vadd.f32 %v119, 1.0
    %v127 = vadd.f32 %v121, 1.0
    %v128 = vadd.f32 %v123, 1.0
    %v129 = vadd.f32 %v125, 1.0
    %v130 = vrcp.pop %v126
    %v131 = vmul.f32 %v126, %v130
    %v132 = vsub.f32 1.0, %v131
    %v133 = vmul.f32 %v130, %v132
    %v134 = vadd.f32 %v130, %v133
    %vm135 = vweird.f32 %v126
    %vm136 = vweird.f32 %v130
    %vm137 = vmor %vm135, %vm136
    %v138 = vsel %vm137, %v130, %v134
    %v139 = vand.u32 2147483647, %v126
    %vm140 = vcmp.eq.f32.partialorder %v139, 8.507059e+37
    %v141 = vand.u32 %v126, 2147483648
    %v142 = vor.u32 1.1754944e-38, %v141
    %v143 = vsel %vm140, %v142, %v138
    %v144 = vmul.f32 1.0, %v143
    %v145 = vrcp.pop %v127
    %v146 = vmul.f32 %v127, %v145
    %v147 = vsub.f32 1.0, %v146
    %v148 = vmul.f32 %v145, %v147
    %v149 = vadd.f32 %v145, %v148
    %vm150 = vweird.f32 %v127
    %vm151 = vweird.f32 %v145
    %vm152 = vmor %vm150, %vm151
    %v153 = vsel %vm152, %v145, %v149
    %v154 = vand.u32 2147483647, %v127
    %vm155 = vcmp.eq.f32.partialorder %v154, 8.507059e+37
    %v156 = vand.u32 %v127, 2147483648
    %v157 = vor.u32 1.1754944e-38, %v156
    %v158 = vsel %vm155, %v157, %v153
    %v159 = vmul.f32 1.0, %v158
    %v160 = vrcp.pop %v128
    %v161 = vmul.f32 %v128, %v160
    %v162 = vsub.f32 1.0, %v161
    %v163 = vmul.f32 %v160, %v162
    %v164 = vadd.f32 %v160, %v163
    %vm165 = vweird.f32 %v128
    %vm166 = vweird.f32 %v160
    %vm167 = vmor %vm165, %vm166
    %v168 = vsel %vm167, %v160, %v164
    %v169 = vand.u32 2147483647, %v128
    %vm170 = vcmp.eq.f32.partialorder %v169, 8.507059e+37
    %v171 = vand.u32 %v128, 2147483648
    %v172 = vor.u32 1.1754944e-38, %v171
    %v173 = vsel %vm170, %v172, %v168
    %v174 = vmul.f32 1.0, %v173
    %v175 = vrcp.pop %v129
    %v176 = vmul.f32 %v129, %v175
    %v177 = vsub.f32 1.0, %v176
    %v178 = vmul.f32 %v175, %v177
    %v179 = vadd.f32 %v175, %v178
    %vm180 = vweird.f32 %v129
    %vm181 = vweird.f32 %v175
    %vm182 = vmor %vm180, %vm181
    %v183 = vsel %vm182, %v175, %v179
    %v184 = vand.u32 2147483647, %v129
    %vm185 = vcmp.eq.f32.partialorder %v184, 8.507059e+37
    %v186 = vand.u32 %v129, 2147483648
    %v187 = vor.u32 1.1754944e-38, %v186
    %v188 = vsel %vm185, %v187, %v183
    %v189 = vmul.f32 1.0, %v188
    %v190 = vld [vmem:[#allocation2] sm:$0xff]
    %v191 = vld [vmem:[#allocation2 + $0x8] sm:$0xff]
    %v192 = vld [vmem:[#allocation2 + $0x10] sm:$0xff]
    %v193 = vld [vmem:[#allocation2 + $0x18] sm:$0xff]
    %v194 = vld [vmem:[#allocation2 + $0x20] sm:$0xff]
    %v195 = vld [vmem:[#allocation2 + $0x28] sm:$0xff]
    %v196 = vld [vmem:[#allocation2 + $0x30] sm:$0xff]
    %v197 = vld [vmem:[#allocation2 + $0x38] sm:$0xff]
    %v198 = vld [vmem:[#allocation2 + $0x40] sm:$0xff]
    %v199 = vld [vmem:[#allocation2 + $0x48] sm:$0xff]
    %v200 = vld [vmem:[#allocation2 + $0x50] sm:$0xff]
    %v201 = vld [vmem:[#allocation2 + $0x58] sm:$0xff]
    %v202 = vld [vmem:[#allocation2 + $0x60] sm:$0xff]
    %v203 = vld [vmem:[#allocation2 + $0x68] sm:$0xff]
    %v204 = vld [vmem:[#allocation2 + $0x70] sm:$0xff]
    %v205 = vld [vmem:[#allocation2 + $0x78] sm:$0xff]
    %v206 = vld [vmem:[%s4] sm:$0x1]
    %v208 = vperm.slane %v206, 0
    %210 = vmatpush.msra.mxu0 %v205
    %211 = vmatpush.msra.mxu0 %v204
    %212 = vmatpush.msra.mxu0 %v203
    %213 = vmatpush.msra.mxu0 %v202
    %214 = vmatpush.msra.mxu0 %v201
    %215 = vmatpush.msra.mxu0 %v200
    %216 = vmatpush.msra.mxu0 %v199
    %217 = vmatpush.msra.mxu0 %v198
    %218 = vmatpush.msra.mxu0 %v197
    %219 = vmatpush.msra.mxu0 %v196
    %220 = vmatpush.msra.mxu0 %v195
    %221 = vmatpush.msra.mxu0 %v194
    %222 = vmatpush.msra.mxu0 %v193
    %223 = vmatpush.msra.mxu0 %v192
    %224 = vmatpush.msra.mxu0 %v191
    %225 = vmatpush.msra.mxu0 %v190
    %226 = vmatmul.f32.gmra.mxu0 %v144
    %v227 = vpop.f32.mrf.mxu0
    %v228 = vadd.f32 %v208, %v227
    %229 = vmatmul.f32.gmra.mxu0 %v159
    %v230 = vpop.f32.mrf.mxu0
    %v231 = vadd.f32 %v208, %v230
    %232 = vmatmul.f32.gmra.mxu0 %v174
    %v233 = vpop.f32.mrf.mxu0
    %v234 = vadd.f32 %v208, %v233
    %235 = vmatmul.f32.gmra.mxu0 %v189
    %v236 = vpop.f32.mrf.mxu0
    %v237 = vadd.f32 %v208, %v236
    %238 = vdwg.mxu0
    %v239 = vxor.u32 %v228, 2147483648
    %v240 = vxor.u32 %v231, 2147483648
    %v241 = vxor.u32 %v234, 2147483648
    %v242 = vxor.u32 %v237, 2147483648
    %v243 = vmul.f32 %v239, 1.442695
    %v244 = vpow.pop %v243
    %v245 = vmul.f32 %v240, 1.442695
    %v246 = vpow.pop %v245
    %v247 = vmul.f32 %v241, 1.442695
    %v248 = vpow.pop %v247
    %v249 = vmul.f32 %v242, 1.442695
    %v250 = vpow.pop %v249
    %v251 = vadd.f32 %v244, 1.0
    %v252 = vadd.f32 %v246, 1.0
    %v253 = vadd.f32 %v248, 1.0
    %v254 = vadd.f32 %v250, 1.0
    %v255 = vrcp.pop %v251
    %v256 = vmul.f32 %v251, %v255
    %v257 = vsub.f32 1.0, %v256
    %v258 = vmul.f32 %v255, %v257
    %v259 = vadd.f32 %v255, %v258
    %vm260 = vweird.f32 %v251
    %vm261 = vweird.f32 %v255
    %vm262 = vmor %vm260, %vm261
    %v263 = vsel %vm262, %v255, %v259
    %v264 = vand.u32 2147483647, %v251
    %vm265 = vcmp.eq.f32.partialorder %v264, 8.507059e+37
    %v266 = vand.u32 %v251, 2147483648
    %v267 = vor.u32 1.1754944e-38, %v266
    %v268 = vsel %vm265, %v267, %v263
    %v269 = vmul.f32 1.0, %v268
    %v270 = vrcp.pop %v252
    %v271 = vmul.f32 %v252, %v270
    %v272 = vsub.f32 1.0, %v271
    %v273 = vmul.f32 %v270, %v272
    %v274 = vadd.f32 %v270, %v273
    %vm275 = vweird.f32 %v252
    %vm276 = vweird.f32 %v270
    %vm277 = vmor %vm275, %vm276
    %v278 = vsel %vm277, %v270, %v274
    %v279 = vand.u32 2147483647, %v252
    %vm280 = vcmp.eq.f32.partialorder %v279, 8.507059e+37
    %v281 = vand.u32 %v252, 2147483648
    %v282 = vor.u32 1.1754944e-38, %v281
    %v283 = vsel %vm280, %v282, %v278
    %v284 = vmul.f32 1.0, %v283
    %v285 = vrcp.pop %v253
    %v286 = vmul.f32 %v253, %v285
    %v287 = vsub.f32 1.0, %v286
    %v288 = vmul.f32 %v285, %v287
    %v289 = vadd.f32 %v285, %v288
    %vm290 = vweird.f32 %v253
    %vm291 = vweird.f32 %v285
    %vm292 = vmor %vm290, %vm291
    %v293 = vsel %vm292, %v285, %v289
    %v294 = vand.u32 2147483647, %v253
    %vm295 = vcmp.eq.f32.partialorder %v294, 8.507059e+37
    %v296 = vand.u32 %v253, 2147483648
    %v297 = vor.u32 1.1754944e-38, %v296
    %v298 = vsel %vm295, %v297, %v293
    %v299 = vmul.f32 1.0, %v298
    %v300 = vrcp.pop %v254
    %v301 = vmul.f32 %v254, %v300
    %v302 = vsub.f32 1.0, %v301
    %v303 = vmul.f32 %v300, %v302
    %v304 = vadd.f32 %v300, %v303
    %vm305 = vweird.f32 %v254
    %vm306 = vweird.f32 %v300
    %vm307 = vmor %vm305, %vm306
    %v308 = vsel %vm307, %v300, %v304
    %v309 = vand.u32 2147483647, %v254
    %vm310 = vcmp.eq.f32.partialorder %v309, 8.507059e+37
    %v311 = vand.u32 %v254, 2147483648
    %v312 = vor.u32 1.1754944e-38, %v311
    %v313 = vsel %vm310, %v312, %v308
    %v314 = vmul.f32 1.0, %v313
    %v315 = vld [vmem:[#allocation5] sm:$0xff]
    %v316 = vld [vmem:[#allocation5 + $0x8] sm:$0xff]
    %v317 = vld [vmem:[#allocation5 + $0x10] sm:$0xff]
    %v318 = vld [vmem:[#allocation5 + $0x18] sm:$0xff]
    %v319 = vld [vmem:[#allocation5 + $0x20] sm:$0xff]
    %v320 = vld [vmem:[#allocation5 + $0x28] sm:$0xff]
    %v321 = vld [vmem:[#allocation5 + $0x30] sm:$0xff]
    %v322 = vld [vmem:[#allocation5 + $0x38] sm:$0xff]
    %v323 = vld [vmem:[#allocation5 + $0x40] sm:$0xff]
    %v324 = vld [vmem:[#allocation5 + $0x48] sm:$0xff]
    %v325 = vld [vmem:[#allocation5 + $0x50] sm:$0xff]
    %v326 = vld [vmem:[#allocation5 + $0x58] sm:$0xff]
    %v327 = vld [vmem:[#allocation5 + $0x60] sm:$0xff]
    %v328 = vld [vmem:[#allocation5 + $0x68] sm:$0xff]
    %v329 = vld [vmem:[#allocation5 + $0x70] sm:$0xff]
    %v330 = vld [vmem:[#allocation5 + $0x78] sm:$0xff]
    %v331 = vld [vmem:[%s6] sm:$0x1]
    %v333 = vperm.slane %v331, 0
    %335 = vmatpush.msra.mxu0 %v330
    %336 = vmatpush.msra.mxu0 %v329
    %337 = vmatpush.msra.mxu0 %v328
    %338 = vmatpush.msra.mxu0 %v327
    %339 = vmatpush.msra.mxu0 %v326
    %340 = vmatpush.msra.mxu0 %v325
    %341 = vmatpush.msra.mxu0 %v324
    %342 = vmatpush.msra.mxu0 %v323
    %343 = vmatpush.msra.mxu0 %v322
    %344 = vmatpush.msra.mxu0 %v321
    %345 = vmatpush.msra.mxu0 %v320
    %346 = vmatpush.msra.mxu0 %v319
    %347 = vmatpush.msra.mxu0 %v318
    %348 = vmatpush.msra.mxu0 %v317
    %349 = vmatpush.msra.mxu0 %v316
    %350 = vmatpush.msra.mxu0 %v315
    %351 = vmatmul.f32.gmra.mxu0 %v269
    %v352 = vpop.f32.mrf.mxu0
    %v353 = vadd.f32 %v333, %v352
    %354 = vmatmul.f32.gmra.mxu0 %v284
    %v355 = vpop.f32.mrf.mxu0
    %v356 = vadd.f32 %v333, %v355
    %357 = vmatmul.f32.gmra.mxu0 %v299
    %v358 = vpop.f32.mrf.mxu0
    %v359 = vadd.f32 %v333, %v358
    %360 = vmatmul.f32.gmra.mxu0 %v314
    %v361 = vpop.f32.mrf.mxu0
    %v362 = vadd.f32 %v333, %v361
    %363 = vdwg.mxu0
    %364 = vst [vmem:[#allocation7] sm:$0xff] %v353
    %365 = vst [vmem:[#allocation7 + $0x8] sm:$0xff] %v356
    %366 = vst [vmem:[#allocation7 + $0x10] sm:$0xff] %v359
    %367 = vst [vmem:[#allocation7 + $0x18] sm:$0xff] %v362
    // Predicated region
    $region38: #{tpu_custom_call.1} parent=1 // pred_check
      _
    $region39: #{tpu_custom_call.1} parent=1 // pred_check_branch
      %369 = sbr.rel (0) target = $region41
    $region40: #{tpu_custom_call.1} parent=1 // pred_region
      %371 = vsyncadd [#allocation4], 0
      %s372 = sshll.u32 [#allocation7], 4
      %s373 = int_to_ptr.vmem [resolvable:$true] %s372
      %s374 = sshll.u32 %s7, 4
      %s375 = int_to_ptr.hbm [resolvable:$true] %s374
      %380 = dma.vmem_to_hbm [thread:$0]  %s373, 512, %s375, [#allocation4], 128, 128, 8
    $region41: #{tpu_custom_call.1} parent=1 // pred_fallthru
      _
    // Predicated region
    $region42: #{tpu_custom_call.1} parent=1 // pred_check
      _
    $region43: #{tpu_custom_call.1} parent=1 // pred_check_branch
      %382 = sbr.rel (0) target = $region45
    $region44: #{tpu_custom_call.1} parent=1 // pred_region
      %384 = dma.done [#allocation4], 512
    $region45: #{tpu_custom_call.1} parent=1 // pred_fallthru
      _
    %385 = vsyncpa [#allocation3], 1
    %386 = vsyncpa [#allocation6], 1
    %387 = vsyncpa [#allocation4], 1

</llo_original>
